<compile_context>
chip_gen: v5e
topology: v5e:2x2
jax: 0.10.0
libtpu: 0.0.40
codegen_flags: <defaults>
</compile_context>

<pallas_src>
import functools

import jax
import jax.numpy as jnp
from jax.experimental import pallas as pl
from jax.experimental.pallas import tpu as pltpu


def _round_up(v, m):
    return (v + m - 1) // m * m


# ---------------------------------------------------------------------------
# Pallas kernel: one GCN layer   out = epilogue(A_hat @ (X @ W) + b)
# ---------------------------------------------------------------------------
def _gcn_layer_kernel(a_ref, x_ref, w_ref, b_ref, o_ref, acc_ref, *, epilogue):
    k = pl.program_id(1)

    @pl.when(k == 0)
    def _():
        acc_ref[...] = jnp.zeros_like(acc_ref)

    # Small feature transform on the streamed node block, then aggregate with
    # the A_hat tile.  Both matmuls hit the MXU in bf16, accumulate in f32.
    xw = jnp.dot(x_ref[...], w_ref[...], preferred_element_type=jnp.float32)
    acc_ref[...] += jnp.dot(a_ref[...], xw.astype(jnp.bfloat16),
                            preferred_element_type=jnp.float32)

    @pl.when(k == pl.num_programs(1) - 1)
    def _():
        z = acc_ref[...] + b_ref[...]                          # f32 epilogue
        if epilogue == "relu":
            o_ref[...] = jnp.maximum(z, 0.0).astype(o_ref.dtype)
        else:
            # Softmax over the lane-padded class dim; padded lanes carry a
            # -1e30 bias -> exp underflows to 0 and they drop out of the sum.
            z = z - jnp.max(z, axis=-1, keepdims=True)
            e = jnp.exp(z)
            denom = jnp.sum(e, axis=-1, keepdims=True)
            o_ref[...] = (e * pl.reciprocal(denom, approx=True)).astype(o_ref.dtype)


def _gcn_layer(a_hat, x, w, b, *, epilogue, out_dtype, tile):
    n_pad = a_hat.shape[0]
    fin = x.shape[1]
    fout = w.shape[1]
    grid = (n_pad // tile, n_pad // tile)

    return pl.pallas_call(
        functools.partial(_gcn_layer_kernel, epilogue=epilogue),
        out_shape=jax.ShapeDtypeStruct((n_pad, fout), out_dtype),
        grid_spec=pltpu.PrefetchScalarGridSpec(
            num_scalar_prefetch=0,
            grid=grid,
            in_specs=[
                pl.BlockSpec((tile, tile), lambda i, k: (i, k)),  # A_hat tile (streams)
                pl.BlockSpec((tile, fin), lambda i, k: (k, 0)),   # node features (streams over k)
                pl.BlockSpec((fin, fout), lambda i, k: (0, 0)),   # W  (VMEM-resident)
                pl.BlockSpec((1, fout), lambda i, k: (0, 0)),     # b  (VMEM-resident)
            ],
            out_specs=pl.BlockSpec((tile, fout), lambda i, k: (i, 0)),
            scratch_shapes=[pltpu.VMEM((tile, fout), jnp.float32)],
        ),
        compiler_params=pltpu.CompilerParams(
            dimension_semantics=("parallel", "arbitrary"),
            vmem_limit_bytes=32 * 1024 * 1024,
        ),
    )(a_hat, x, w, b)


# ---------------------------------------------------------------------------
# Wrapper: pad to tile/lane multiples, run the two fused layers, slice back.
# ---------------------------------------------------------------------------
def gnn_forward(a_hat, x, w1, b1, w2, b2, *, tile=None):
    n = x.shape[0]
    f_in = x.shape[1]
    hidden = w1.shape[1]
    n_cls = w2.shape[1]

    if tile is None:
        # Whole (8-padded) graph if small; 512 tiles otherwise (fits v5e's
        # 16 MiB scoped default and v7x's 64 MiB VMEM with double buffering).
        tile = _round_up(n, 8) if n <= 512 else 512
    n_pad = _round_up(n, tile)
    h_pad = _round_up(hidden, 128)   # lane-dense intermediate store
    c_pad = _round_up(n_cls, 128)    # lane-dense output store

    a_p = jnp.zeros((n_pad, n_pad), jnp.bfloat16).at[:n, :n].set(
        a_hat.astype(jnp.bfloat16))
    x_p = jnp.zeros((n_pad, f_in), jnp.bfloat16).at[:n, :].set(
        x.astype(jnp.bfloat16))

    w1_p = jnp.zeros((f_in, h_pad), jnp.bfloat16).at[:, :hidden].set(
        w1.astype(jnp.bfloat16))
    b1_p = jnp.zeros((1, h_pad), jnp.float32).at[0, :hidden].set(
        b1.reshape(-1).astype(jnp.float32))

    w2_p = jnp.zeros((h_pad, c_pad), jnp.bfloat16).at[:hidden, :n_cls].set(
        w2.astype(jnp.bfloat16))
    # Padded class lanes get a hugely negative bias so softmax sends them to 0.
    b2_p = jnp.full((1, c_pad), -1e30, jnp.float32).at[0, :n_cls].set(
        b2.reshape(-1).astype(jnp.float32))

    h = _gcn_layer(a_p, x_p, w1_p, b1_p, epilogue="relu",
                   out_dtype=jnp.bfloat16, tile=tile)
    out = _gcn_layer(a_p, h, w2_p, b2_p, epilogue="softmax",
                     out_dtype=jnp.float32, tile=tile)
    return out[:n, :n_cls]


# ---------------------------------------------------------------------------
# Glue: symmetrically-normalized adjacency with self-loops (plain JAX)
# ---------------------------------------------------------------------------
def build_norm_adj(edge_index, num_nodes):
    src, dst = edge_index[0], edge_index[1]
    loop = jnp.arange(num_nodes, dtype=src.dtype)
    src = jnp.concatenate([src, loop])
    dst = jnp.concatenate([dst, loop])
    # A[i, j] counts edges j -> i (matches PyG aggregation direction)
    a = jnp.zeros((num_nodes, num_nodes), jnp.float32).at[dst, src].add(1.0)
    deg = a.sum(axis=1)
    dinv = jnp.where(deg > 0, 1.0 / jnp.sqrt(deg), 0.0)
    return dinv[:, None] * a * dinv[None, :]


# ---------------------------------------------------------------------------
# Pure-JAX reference (f32) for correctness checking
# ---------------------------------------------------------------------------
def gnn_reference(a_hat, x, w1, b1, w2, b2):
    h = jnp.maximum(a_hat @ (x @ w1) + b1, 0.0)
    z = a_hat @ (h @ w2) + b2
    z = z - jnp.max(z, axis=-1, keepdims=True)
    e = jnp.exp(z)
    return e / jnp.sum(e, axis=-1, keepdims=True)


if __name__ == "__main__":
    # Shapes implied by the module: input_size=10, hidden_size=32, num_classes=2
    input_size, hidden_size, num_classes = 10, 32, 2

    key = jax.random.PRNGKey(0)
    k_x, k_w1, k_b1, k_w2, k_b2, k_extra = jax.random.split(key, 6)

    # Deterministic synthetic parameters (glorot-ish scale).
    w1 = jax.random.normal(k_w1, (input_size, hidden_size), jnp.float32) * 0.1
    b1 = jax.random.normal(k_b1, (1, hidden_size), jnp.float32) * 0.01
    w2 = jax.random.normal(k_w2, (hidden_size, num_classes), jnp.float32) * 0.1
    b2 = jax.random.normal(k_b2, (1, num_classes), jnp.float32) * 0.01

    # --- Case 1: the module's tiny single-graph shapes ----------------------
    num_nodes = 8
    x = jax.random.normal(k_x, (num_nodes, input_size), jnp.float32)
    edge_index = jnp.array([[0, 0], [0, 0]], dtype=jnp.int32)
    a_hat = build_norm_adj(edge_index, num_nodes)

    out = jax.block_until_ready(gnn_forward(a_hat, x, w1, b1, w2, b2))
    ref = gnn_reference(a_hat, x, w1, b1, w2, b2)

    assert out.shape == (num_nodes, num_classes)
    assert bool(jnp.allclose(out.sum(axis=-1), 1.0, atol=5e-3))   # approx recip ~1e-3
    assert bool(jnp.allclose(out, ref, atol=3e-2))                # bf16 MXU path

    # --- Case 2: larger graph exercising the multi-tile grid + padding ------
    n2 = 200
    k_x2, k_src, k_dst = jax.random.split(k_extra, 3)
    x2 = jax.random.normal(k_x2, (n2, input_size), jnp.float32)
    src = jax.random.randint(k_src, (600,), 0, n2, dtype=jnp.int32)
    dst = jax.random.randint(k_dst, (600,), 0, n2, dtype=jnp.int32)
    a2 = build_norm_adj(jnp.stack([src, dst]), n2)

    out2 = jax.block_until_ready(gnn_forward(a2, x2, w1, b1, w2, b2, tile=128))
    ref2 = gnn_reference(a2, x2, w1, b1, w2, b2)

    assert out2.shape == (n2, num_classes)
    assert bool(jnp.allclose(out2.sum(axis=-1), 1.0, atol=5e-3))
    assert bool(jnp.allclose(out2, ref2, atol=3e-2))

    print("KERNEL_OK")
</pallas_src>

<mosaic_0001>
module attributes {stable_mosaic.version = 11 : i64} {
  func.func @_gcn_layer_kernel(%arg0: i32, %arg1: i32, %arg2: memref<8x8xbf16, #tpu.memory_space<vmem>>, %arg3: memref<8x10xbf16, #tpu.memory_space<vmem>>, %arg4: memref<10x128xbf16, #tpu.memory_space<vmem>>, %arg5: memref<1x128xf32, #tpu.memory_space<vmem>>, %arg6: memref<8x128xbf16, #tpu.memory_space<vmem>>, %arg7: memref<8x128xf32, #tpu.memory_space<vmem>>) attributes {dimension_semantics = [#tpu.dimension_semantics<parallel>, #tpu.dimension_semantics<arbitrary>], iteration_bounds = array<i64: 1, 1>, scalar_prefetch = 0 : i64, scratch_operands = 1 : i64, tpu.core_type = #tpu.core_type<tc>, window_params = [{transform_indices = @transform_0, window_bounds = array<i64: 8, 8>}, {transform_indices = @transform_1, window_bounds = array<i64: 8, 10>}, {pipeline_mode = #tpu.pipeline_mode<synchronous>, transform_indices = @transform_2, window_bounds = array<i64: 10, 128>}, {pipeline_mode = #tpu.pipeline_mode<synchronous>, transform_indices = @transform_3, window_bounds = array<i64: 1, 128>}, {transform_indices = @transform_4, window_bounds = array<i64: 8, 128>}]} {
    %c0_i32 = arith.constant 0 : i32
    %0 = arith.cmpi eq, %arg1, %c0_i32 : i32
    %1 = arith.extui %0 : i1 to i32
    %c0_i32_0 = arith.constant 0 : i32
    %2 = arith.cmpi ne, %1, %c0_i32_0 : i32
    scf.if %2 {
      %cst_13 = arith.constant 0.000000e+00 : f32
      %15 = vector.broadcast %cst_13 : f32 to vector<8x128xf32>
      %c0_14 = arith.constant 0 : index
      %c0_15 = arith.constant 0 : index
      %16 = vector.load %arg7[%c0_14, %c0_15] : memref<8x128xf32, #tpu.memory_space<vmem>>, vector<8x128xf32>
      tpu.vector_store %arg7[%c0_14, %c0_15], %15 {strides = array<i32>} : memref<8x128xf32, #tpu.memory_space<vmem>>, vector<8x128xf32>,
    } else {
    }
    %c0 = arith.constant 0 : index
    %c0_1 = arith.constant 0 : index
    %3 = vector.load %arg3[%c0, %c0_1] : memref<8x10xbf16, #tpu.memory_space<vmem>>, vector<8x10xbf16>
    %c0_2 = arith.constant 0 : index
    %c0_3 = arith.constant 0 : index
    %4 = vector.load %arg4[%c0_2, %c0_3] : memref<10x128xbf16, #tpu.memory_space<vmem>>, vector<10x128xbf16>
    %cst = arith.constant dense<0.000000e+00> : vector<8x128xf32>
    %5 = tpu.matmul %3, %4, %cst {dimension_numbers = #tpu.dot_dimension_numbers<[1], [0], [0], [1], [0, 0, 1, 1], [], []>} : vector<8x10xbf16>, vector<10x128xbf16>, vector<8x128xf32> -> vector<8x128xf32>
    %c0_4 = arith.constant 0 : index
    %c0_5 = arith.constant 0 : index
    %6 = vector.load %arg7[%c0_4, %c0_5] : memref<8x128xf32, #tpu.memory_space<vmem>>, vector<8x128xf32>
    %c0_6 = arith.constant 0 : index
    %c0_7 = arith.constant 0 : index
    %7 = vector.load %arg2[%c0_6, %c0_7] : memref<8x8xbf16, #tpu.memory_space<vmem>>, vector<8x8xbf16>
    %8 = arith.truncf %5 : vector<8x128xf32> to vector<8x128xbf16>
    %cst_8 = arith.constant dense<0.000000e+00> : vector<8x128xf32>
    %9 = tpu.matmul %7, %8, %cst_8 {dimension_numbers = #tpu.dot_dimension_numbers<[1], [0], [0], [1], [0, 0, 1, 1], [], []>} : vector<8x8xbf16>, vector<8x128xbf16>, vector<8x128xf32> -> vector<8x128xf32>
    %10 = arith.addf %6, %9 : vector<8x128xf32>
    %c0_9 = arith.constant 0 : index
    %c0_10 = arith.constant 0 : index
    %11 = vector.load %arg7[%c0_9, %c0_10] : memref<8x128xf32, #tpu.memory_space<vmem>>, vector<8x128xf32>
    tpu.vector_store %arg7[%c0_9, %c0_10], %10 {strides = array<i32>} : memref<8x128xf32, #tpu.memory_space<vmem>>, vector<8x128xf32>,
    %c0_i32_11 = arith.constant 0 : i32
    %12 = arith.cmpi eq, %arg1, %c0_i32_11 : i32
    %13 = arith.extui %12 : i1 to i32
    %c0_i32_12 = arith.constant 0 : i32
    %14 = arith.cmpi ne, %13, %c0_i32_12 : i32
    scf.if %14 {
      %c0_13 = arith.constant 0 : index
      %c0_14 = arith.constant 0 : index
      %15 = vector.load %arg7[%c0_13, %c0_14] : memref<8x128xf32, #tpu.memory_space<vmem>>, vector<8x128xf32>
      %c0_15 = arith.constant 0 : index
      %c0_16 = arith.constant 0 : index
      %16 = vector.load %arg5[%c0_15, %c0_16] : memref<1x128xf32, #tpu.memory_space<vmem>>, vector<1x128xf32>
      %17 = vector.broadcast %16 : vector<1x128xf32> to vector<8x128xf32>
      %18 = arith.addf %15, %17 : vector<8x128xf32>
      %cst_17 = arith.constant 0.000000e+00 : f32
      %19 = vector.broadcast %cst_17 : f32 to vector<8x128xf32>
      %20 = arith.maximumf %18, %19 : vector<8x128xf32>
      %21 = arith.truncf %20 : vector<8x128xf32> to vector<8x128xbf16>
      %c0_18 = arith.constant 0 : index
      %c0_19 = arith.constant 0 : index
      %22 = vector.load %arg6[%c0_18, %c0_19] : memref<8x128xbf16, #tpu.memory_space<vmem>>, vector<8x128xbf16>
      tpu.vector_store %arg6[%c0_18, %c0_19], %21 {strides = array<i32>} : memref<8x128xbf16, #tpu.memory_space<vmem>>, vector<8x128xbf16>,
    } else {
    }
    return
  }
  func.func @transform_0(%arg0: i32, %arg1: i32) -> (i32, i32) {
    %c0_i32 = arith.constant 0 : i32
    return %arg0, %arg1 : i32, i32
  }
  func.func @transform_1(%arg0: i32, %arg1: i32) -> (i32, i32) {
    %c0_i32 = arith.constant 0 : i32
    %c0_i32_0 = arith.constant 0 : i32
    return %arg1, %c0_i32 : i32, i32
  }
  func.func @transform_2(%arg0: i32, %arg1: i32) -> (i32, i32) {
    %c0_i32 = arith.constant 0 : i32
    %c0_i32_0 = arith.constant 0 : i32
    %c0_i32_1 = arith.constant 0 : i32
    return %c0_i32, %c0_i32_0 : i32, i32
  }
  func.func @transform_3(%arg0: i32, %arg1: i32) -> (i32, i32) {
    %c0_i32 = arith.constant 0 : i32
    %c0_i32_0 = arith.constant 0 : i32
    %c0_i32_1 = arith.constant 0 : i32
    return %c0_i32, %c0_i32_0 : i32, i32
  }
  func.func @transform_4(%arg0: i32, %arg1: i32) -> (i32, i32) {
    %c0_i32 = arith.constant 0 : i32
    %c0_i32_0 = arith.constant 0 : i32
    return %arg0, %c0_i32 : i32, i32
  }
}

</mosaic_0001>

<llo_original>
// kernel: tpu_custom_call.1
$region0: #{tpu_custom_call.1}
  #allocation0 [shape = 'u32[]', space=smem, size = 0x4, offset = 0x4, fixed_abs, tag = 'smem constant byte address 0x4 - core index']
  #allocation1 [shape = 'u32[72,128]{1,0:T(1,128)}', space=vmem, size = 0x9000, scoped, tag = 'internal scratch']
  #allocation2 [shape = 'f32[8,128]{1,0:T(8,128)}', space=vmem, size = 0x1000, scoped, tag = 'scratch operand']
  %s0 = inlined_call_operand.hbm [shape: bf16[8,8], index: 0, kind: input, shape index: {}]
  %s1 = inlined_call_operand.hbm [shape: bf16[8,10], index: 1, kind: input, shape index: {}]
  %s2 = inlined_call_operand.hbm [shape: bf16[10,128], index: 2, kind: input, shape index: {}]
  %s3 = inlined_call_operand.vmem [shape: f32[1,128], index: 3, kind: input, shape index: {}]
  %s4 = inlined_call_operand.hbm [shape: bf16[8,128], index: 4, kind: output, shape index: {}]
  %s5 = sld [smem:[#allocation0]]
  $region46: #{tpu_custom_call.1} parent=0
    _
  %s7 = ssub.s32 1, %s5
  %s8 = scalar_select 0, %s7, %s5
  $region1: #{tpu_custom_call.1} parent=0
    #allocation3 [shape = 'u8[2048]{0}', space=vmem, size = 0x800, scoped, tag = 'input window, operand 0, single buffered']
    #allocation4 [shape = 's32[1]{0}', space=sflag, size = 0x4, scoped, tag = 'scoped memory for tpu_custom_call.1']
    #allocation5 [shape = 's32[1]{0}', space=sflag, size = 0x4, scoped, tag = 'scoped memory for tpu_custom_call.1']
    #allocation6 [shape = 'u8[2048]{0}', space=vmem, size = 0x800, scoped, tag = 'input window, operand 1, single buffered']
    #allocation7 [shape = 's32[1]{0}', space=sflag, size = 0x4, scoped, tag = 'scoped memory for tpu_custom_call.1']
    #allocation8 [shape = 'u8[4096]{0}', space=vmem, size = 0x1000, scoped, tag = 'input window, operand 2, single buffered']
    #allocation9 [shape = 'u8[2048]{0}', space=vmem, size = 0x800, scoped, tag = 'output window, operand 0, single buffered']
    %9 = vsyncpa [#allocation4], 0
    %10 = vsyncpa [#allocation7], 0
    %11 = vsyncpa [#allocation5], 0
    // Predicated region
    $region2: #{tpu_custom_call.1} parent=1 // pred_check
      _
    $region3: #{tpu_custom_call.1} parent=1 // pred_check_branch
      %13 = sbr.rel (0) target = $region5
    $region4: #{tpu_custom_call.1} parent=1 // pred_region
      %15 = vsyncadd [#allocation4], 0
      %s17 = sshll.u32 %s0, 4
      %s18 = int_to_ptr.hbm [resolvable:$true] %s17
      %s19 = sshll.u32 [#allocation3], 4
      %s20 = int_to_ptr.vmem [resolvable:$true] %s19
      %22 = dma.hbm_to_vmem [thread:$0]  %s18, 64, %s20, [#allocation4]
    $region5: #{tpu_custom_call.1} parent=1 // pred_fallthru
      _
    // Predicated region
    $region6: #{tpu_custom_call.1} parent=1 // pred_check
      _
    $region7: #{tpu_custom_call.1} parent=1 // pred_check_branch
      %24 = sbr.rel (0) target = $region9
    $region8: #{tpu_custom_call.1} parent=1 // pred_region
      %26 = vsyncadd [#allocation7], 0
      %s28 = sshll.u32 %s1, 4
      %s29 = int_to_ptr.hbm [resolvable:$true] %s28
      %s30 = sshll.u32 [#allocation6], 4
      %s31 = int_to_ptr.vmem [resolvable:$true] %s30
      %33 = dma.hbm_to_vmem [thread:$0]  %s29, 64, %s31, [#allocation7]
    $region9: #{tpu_custom_call.1} parent=1 // pred_fallthru
      _
    // Predicated region
    $region10: #{tpu_custom_call.1} parent=1 // pred_check
      _
    $region11: #{tpu_custom_call.1} parent=1 // pred_check_branch
      %35 = sbr.rel (0) target = $region13
    $region12: #{tpu_custom_call.1} parent=1 // pred_region
      %37 = vsyncadd [#allocation7], 0
      %s38 = sshll.u32 %s2, 4
      %s39 = int_to_ptr.hbm [resolvable:$true] %s38
      %s40 = sshll.u32 [#allocation8], 4
      %s41 = int_to_ptr.vmem [resolvable:$true] %s40
      %46 = dma.hbm_to_vmem [thread:$0]  %s39, 128, %s41, [#allocation7], 64, 64, 4
    $region13: #{tpu_custom_call.1} parent=1 // pred_fallthru
      _
    // Predicated region
    $region14: #{tpu_custom_call.1} parent=1 // pred_check
      _
    $region15: #{tpu_custom_call.1} parent=1 // pred_check_branch
      %48 = sbr.rel (0) target = $region17
    $region16: #{tpu_custom_call.1} parent=1 // pred_region
      _
    $region17: #{tpu_custom_call.1} parent=1 // pred_fallthru
      _
    // Predicated region
    $region18: #{tpu_custom_call.1} parent=1 // pred_check
      _
    $region19: #{tpu_custom_call.1} parent=1 // pred_check_branch
      %50 = sbr.rel (0) target = $region21
    $region20: #{tpu_custom_call.1} parent=1 // pred_region
      %52 = dma.done [#allocation4], 64
    $region21: #{tpu_custom_call.1} parent=1 // pred_fallthru
      _
    // Predicated region
    $region22: #{tpu_custom_call.1} parent=1 // pred_check
      _
    $region23: #{tpu_custom_call.1} parent=1 // pred_check_branch
      %54 = sbr.rel (0) target = $region25
    $region24: #{tpu_custom_call.1} parent=1 // pred_region
      %56 = dma.done [#allocation7], 64
    $region25: #{tpu_custom_call.1} parent=1 // pred_fallthru
      _
    // Predicated region
    $region26: #{tpu_custom_call.1} parent=1 // pred_check
      _
    $region27: #{tpu_custom_call.1} parent=1 // pred_check_branch
      %58 = sbr.rel (0) target = $region29
    $region28: #{tpu_custom_call.1} parent=1 // pred_region
      %60 = dma.done [#allocation7], 128
    $region29: #{tpu_custom_call.1} parent=1 // pred_fallthru
      _
    %p62 = scmp.eq.s32.totalorder 0, 0
    // Predicated region
    $region30: #{tpu_custom_call.1} parent=1 // pred_check
      %p63 = pneg %p62
    $region31: #{tpu_custom_call.1} parent=1 // pred_check_branch
      %65 = sbr.rel (%p63) target = $region33
    $region32: #{tpu_custom_call.1} parent=1 // pred_region
      %66 = vst [vmem:[#allocation2] sm:$0xff] 0.0
    $region33: #{tpu_custom_call.1} parent=1 // pred_fallthru
      _
    %v67 = vld [vmem:[#allocation6] sm:$0xf]
    %v68 = vld [vmem:[#allocation8] sm:$0xf]
    %v69 = vld [vmem:[#allocation8 + $0x4] sm:$0x1]
    %v72 = vunpack.c.l.b16 %v68
    %v73 = vunpack.c.l.b16 %v69
    %v74 = vpack.c.b16 %v73, %v72
    %vm75 = vcmask 80896
    %v77 = vsel %vm75, %v67, 0
    %vm79 = vcmask 1044480
    %v81 = vsel %vm79, %v74, 0
    %83 = vmatpush.bf16.msra.mxu0 0
    %84 = vmatpush.bf16.msra.mxu0 0
    %85 = vmatpush.bf16.msra.mxu0 0
    %86 = vmatpush.bf16.msra.mxu0 0
    %87 = vmatpush.bf16.msra.mxu0 0
    %88 = vmatpush.bf16.msra.mxu0 0
    %89 = vmatpush.bf16.msra.mxu0 0
    %90 = vmatpush.bf16.msra.mxu0 %v81
    %91 = vmatmul.bf16.gmra.mxu0 %v77
    %v92 = vpop.f32.mrf.mxu0
    %v93 = vadd.f32 0.0, %v92
    %v94 = vpop.f32.mrf.mxu0
    %95 = vdwg.mxu0
    %v96 = vld [vmem:[#allocation2] sm:$0xff]
    %v97 = vld [vmem:[#allocation3] sm:$0xf]
    %v98 = vpack.c.bf16 %v93, %v93
    %vm99 = vcmask 64512
    %v101 = vsel %vm99, %v97, 0
    %vm103 = vcmask 1043456
    %v105 = vsel %vm103, %v98, 0
    %107 = vmatpush.bf16.msra.mxu0 0
    %108 = vmatpush.bf16.msra.mxu0 0
    %109 = vmatpush.bf16.msra.mxu0 0
    %110 = vmatpush.bf16.msra.mxu0 0
    %111 = vmatpush.bf16.msra.mxu0 0
    %112 = vmatpush.bf16.msra.mxu0 0
    %113 = vmatpush.bf16.msra.mxu0 0
    %114 = vmatpush.bf16.msra.mxu0 %v105
    %115 = vmatmul.bf16.gmra.mxu0 %v101
    %v116 = vpop.f32.mrf.mxu0
    %v117 = vadd.f32 0.0, %v116
    %v118 = vpop.f32.mrf.mxu0
    %119 = vdwg.mxu0
    %v120 = vadd.f32 %v96, %v117
    %121 = vst [vmem:[#allocation2] sm:$0xff] %v120
    // Predicated region
    $region34: #{tpu_custom_call.1} parent=1 // pred_check
      %p122 = pneg %p62
    $region35: #{tpu_custom_call.1} parent=1 // pred_check_branch
      %124 = sbr.rel (%p122) target = $region37
    $region36: #{tpu_custom_call.1} parent=1 // pred_region
      %v125 = vld [vmem:[#allocation2] sm:$0xff]
      %v126 = vld [vmem:[%s3] sm:$0x1]
      %v128 = vperm.slane %v126, 0
      %v130 = vadd.f32 %v125, %v128
      %v131 = vmax.f32 %v130, 0.0
      %v132 = vpack.c.bf16 %v131, %v131
      %133 = vst [vmem:[#allocation9] sm:$0xf] %v132
    $region37: #{tpu_custom_call.1} parent=1 // pred_fallthru
      _
    // Predicated region
    $region38: #{tpu_custom_call.1} parent=1 // pred_check
      _
    $region39: #{tpu_custom_call.1} parent=1 // pred_check_branch
      %135 = sbr.rel (0) target = $region41
    $region40: #{tpu_custom_call.1} parent=1 // pred_region
      %137 = vsyncadd [#allocation5], 0
      %s139 = sshll.u32 [#allocation9], 4
      %s140 = int_to_ptr.vmem [resolvable:$true] %s139
      %s141 = sshll.u32 %s4, 4
      %s142 = int_to_ptr.hbm [resolvable:$true] %s141
      %144 = dma.vmem_to_hbm [thread:$0]  %s140, 64, %s142, [#allocation5]
    $region41: #{tpu_custom_call.1} parent=1 // pred_fallthru
      _
    // Predicated region
    $region42: #{tpu_custom_call.1} parent=1 // pred_check
      _
    $region43: #{tpu_custom_call.1} parent=1 // pred_check_branch
      %146 = sbr.rel (0) target = $region45
    $region44: #{tpu_custom_call.1} parent=1 // pred_region
      %148 = dma.done [#allocation5], 64
    $region45: #{tpu_custom_call.1} parent=1 // pred_fallthru
      _
    %149 = vsyncpa [#allocation4], 1
    %150 = vsyncpa [#allocation7], 1
    %151 = vsyncpa [#allocation5], 1

</llo_original>
